<compile_context>
chip_gen: v7x
topology: tpu7x:2x2x1
jax: 0.10.0
libtpu: 0.0.40
codegen_flags: <defaults>
</compile_context>

<pallas_src>
import functools

import numpy as np
import jax
import jax.numpy as jnp
from jax import lax
from jax.experimental import pallas as pl
from jax.experimental.pallas import tpu as pltpu


def _cdiv(a, b):
    return -(-a // b)


def _pick_tile_rows(rows, n_parallel, max_tile_rows=4096, min_tile_rows=512,
                    target_parallel_blocks=4):
    """Rows-per-block for a (rows, 128) f32 frame layout.

    * multiple of 8 (sublane) and never larger than `rows` when rows >= 8;
      equal to `rows` (full-dim block) when the frame has fewer than 8 rows,
    * capped at 4096 rows (2 MiB/block f32) so 2 inputs x 2 buffers = 8 MiB
      fits the v5e 16 MiB scoped-VMEM default with headroom,
    * halved (never below min_tile_rows) when n_parallel * n_d would give too
      few independent blocks for the v7x megacore to shard.
    """
    if rows < 8:
        return rows
    tile = min((rows // 8) * 8, max_tile_rows)
    while (n_parallel * _cdiv(rows, tile) < target_parallel_blocks
           and (tile // 2) >= min_tile_rows):
        tile = max(8, ((tile // 2) // 8) * 8)
    return tile


def _frame_block_map(b, d, t, vl_ref):
    """Block index for x/y blocks of shape (1, 1, tile_rows, 128).

    For t >= valid_len[b] the time index is clamped to the last valid frame,
    so consecutive grid steps map to the same block and Pallas re-uses the
    already-resident tile instead of issuing a new DMA."""
    vl = vl_ref[b]
    t_eff = jnp.minimum(t, jnp.maximum(vl - 1, 0))
    return (b, t_eff, d, 0)


def _l1_partial_kernel(rows, tile_rows, acc_rows, n_d,
                       vl_ref, x_ref, y_ref, out_ref):
    """Accumulate per-(batch, d_tile) partial sums of |x - y| over valid t."""
    b = pl.program_id(0)
    d = pl.program_id(1)
    t = pl.program_id(2)

    fold = tile_rows // acc_rows          # static
    has_partial_tail = (rows % tile_rows) != 0   # static

    @pl.when(t == 0)
    def _():
        out_ref[...] = jnp.zeros_like(out_ref)

    def accumulate(mask_tail):
        diff = jnp.abs(x_ref[...].astype(jnp.float32) -
                       y_ref[...].astype(jnp.float32)).reshape(tile_rows, 128)
        if mask_tail:
            # Last d-tile only partially covers the frame: the DMA is clipped
            # to the array bounds and the overhang rows hold unspecified VMEM
            # data, so mask them to zero (VPU compare+select, hidden under DMA).
            row = lax.broadcasted_iota(jnp.int32, (tile_rows, 128), 0)
            diff = jnp.where(row < (rows - d * tile_rows), diff, 0.0)
        if fold > 1:
            # (tile_rows, 128) -> (fold, acc_rows, 128): tile-aligned view,
            # reduced with pure elementwise vreg adds (VPU); no per-step XLU
            # reduction and no scalar work.
            diff = diff.reshape(fold, acc_rows, 128).sum(axis=0)
        out_ref[...] += diff.reshape(1, 1, acc_rows, 128)

    @pl.when(t < vl_ref[b])
    def _():
        if not has_partial_tail:
            accumulate(False)
        elif n_d == 1:
            accumulate(True)
        else:
            @pl.when(d == n_d - 1)
            def _():
                accumulate(True)

            @pl.when(d < n_d - 1)
            def _():
                accumulate(False)


def _masked_l1_partials(x, y, valid_len, rows, tile_rows, acc_rows):
    """x, y: (B, T, rows, 128); valid_len: (B,) int32.

    Returns (B, n_d, acc_rows, 128) f32 partial sums of |x - y| over the valid
    time-steps of each batch element."""
    B, T = x.shape[0], x.shape[1]
    n_d = _cdiv(rows, tile_rows)
    kernel = functools.partial(_l1_partial_kernel, rows, tile_rows, acc_rows, n_d)
    return pl.pallas_call(
        kernel,
        out_shape=jax.ShapeDtypeStruct((B, n_d, acc_rows, 128), jnp.float32),
        grid_spec=pltpu.PrefetchScalarGridSpec(
            num_scalar_prefetch=1,
            grid=(B, n_d, T),
            in_specs=[
                pl.BlockSpec((1, 1, tile_rows, 128), _frame_block_map),
                pl.BlockSpec((1, 1, tile_rows, 128), _frame_block_map),
            ],
            out_specs=pl.BlockSpec((1, 1, acc_rows, 128),
                                   lambda b, d, t, vl: (b, d, 0, 0)),
        ),
        compiler_params=pltpu.CompilerParams(
            dimension_semantics=("parallel", "parallel", "arbitrary"),
            vmem_limit_bytes=32 * 1024 * 1024),
    )(valid_len, x, y)


def recon_loss(inputs, gt, valid_len=None):
    """Forward pass of ReconLoss (nn.L1Loss with optional valid-length masking)."""
    if inputs.ndim == 5:
        B, T = int(inputs.shape[0]), int(inputs.shape[1])
        D = int(np.prod(inputs.shape[2:]))
        x = inputs.reshape(B, T, D)
        y = gt.reshape(B, T, D)
        if valid_len is None:
            # TODO(synk): PyTorch reference requires valid_len for 5D inputs and
            # would raise; we treat "None" as all frames valid.
            vl = jnp.full((B,), T, dtype=jnp.int32)
        else:
            # Clamp to [0, T] so phantom frames never deflate the mean.
            vl = jnp.clip(jnp.asarray(valid_len, jnp.int32), 0, T)
        # Matches torch: mean over sum(valid_len) frames of D elements each.
        denom = jnp.sum(vl).astype(jnp.float32) * jnp.float32(D)
    else:
        # Plain L1 over the whole tensor: one always-valid "frame".
        D = int(np.prod(inputs.shape))
        x = inputs.reshape(1, 1, D)
        y = gt.reshape(1, 1, D)
        vl = jnp.ones((1,), jnp.int32)
        denom = jnp.float32(D)

    B_, T_, D_ = x.shape
    # Lane-dense layout (rows, 128).  Copy-free when D % 128 == 0; otherwise a
    # small (<128 elem/frame) zero-pad is needed so both operands reshape
    # identically (|0 - 0| = 0 on the padding).
    lane_pad = (-D_) % 128
    if lane_pad:
        # TODO(synk): this pad is one extra HBM pass over each operand for
        # non-128-aligned D; removing it requires manual (pl.ANY) DMA handling
        # of the ragged tail.
        x = jnp.pad(x, ((0, 0), (0, 0), (0, lane_pad)))
        y = jnp.pad(y, ((0, 0), (0, 0), (0, lane_pad)))
    rows = (D_ + lane_pad) // 128
    x = x.reshape(B_, T_, rows, 128)
    y = y.reshape(B_, T_, rows, 128)

    tile_rows = _pick_tile_rows(rows, n_parallel=B_)
    acc_rows = 8 if tile_rows % 8 == 0 else tile_rows

    partials = _masked_l1_partials(x, y, vl, rows, tile_rows, acc_rows)
    return jnp.sum(partials) / denom


if __name__ == "__main__":
    key = jax.random.PRNGKey(0)
    k1, k2, k3, k4, k5, k6, k7, k8 = jax.random.split(key, 8)

    # --- 5D case A: [B, T, C, H, W], D = 1024 (128-aligned, no pad), masked.
    B, T, C, H, W = 2, 8, 4, 16, 16
    inputs5 = jax.random.normal(k1, (B, T, C, H, W), dtype=jnp.float32)
    gt5 = jax.random.normal(k2, (B, T, C, H, W), dtype=jnp.float32)
    valid_len = jnp.array([5, 7], dtype=jnp.int32)
    loss5 = jax.block_until_ready(recon_loss(inputs5, gt5, valid_len))
    fi = jnp.concatenate([inputs5[i, :int(valid_len[i])] for i in range(B)], 0)
    fg = jnp.concatenate([gt5[i, :int(valid_len[i])] for i in range(B)], 0)
    ref5 = jnp.mean(jnp.abs(fi - fg))
    assert np.allclose(np.asarray(loss5), np.asarray(ref5), rtol=1e-5, atol=1e-5)

    # --- 5D case B: valid_len=None (treated as all frames valid).
    loss5_all = jax.block_until_ready(recon_loss(inputs5, gt5))
    ref5_all = jnp.mean(jnp.abs(inputs5 - gt5))
    assert np.allclose(np.asarray(loss5_all), np.asarray(ref5_all),
                       rtol=1e-5, atol=1e-5)

    # --- 5D case C: D = 4*40*16 = 2560 -> rows = 20, tile_rows = 16,
    # exercises the partial-last-tile in-kernel mask (no HBM padding).
    inputs5b = jax.random.normal(k5, (2, 6, 4, 40, 16), dtype=jnp.float32)
    gt5b = jax.random.normal(k6, (2, 6, 4, 40, 16), dtype=jnp.float32)
    vlb = jnp.array([6, 3], dtype=jnp.int32)
    loss5b = jax.block_until_ready(recon_loss(inputs5b, gt5b, vlb))
    fib = jnp.concatenate([inputs5b[i, :int(vlb[i])] for i in range(2)], 0)
    fgb = jnp.concatenate([gt5b[i, :int(vlb[i])] for i in range(2)], 0)
    ref5b = jnp.mean(jnp.abs(fib - fgb))
    assert np.allclose(np.asarray(loss5b), np.asarray(ref5b), rtol=1e-5, atol=1e-5)

    # --- 4D case: plain L1 loss over [B, C, H, W].
    inputs4 = jax.random.normal(k3, (2, 4, 16, 16), dtype=jnp.float32)
    gt4 = jax.random.normal(k4, (2, 4, 16, 16), dtype=jnp.float32)
    loss4 = jax.block_until_ready(recon_loss(inputs4, gt4))
    ref4 = jnp.mean(jnp.abs(inputs4 - gt4))
    assert np.allclose(np.asarray(loss4), np.asarray(ref4), rtol=1e-5, atol=1e-5)

    # --- 4D tiny case: D = 384 -> rows = 3 < 8, full-dim (rows,128) block.
    inputs4b = jax.random.normal(k7, (3, 4, 4, 8), dtype=jnp.float32)
    gt4b = jax.random.normal(k8, (3, 4, 4, 8), dtype=jnp.float32)
    loss4b = jax.block_until_ready(recon_loss(inputs4b, gt4b))
    ref4b = jnp.mean(jnp.abs(inputs4b - gt4b))
    assert np.allclose(np.asarray(loss4b), np.asarray(ref4b), rtol=1e-5, atol=1e-5)

    print("KERNEL_OK")
</pallas_src>

<mosaic_0001>
module attributes {stable_mosaic.version = 11 : i64} {
  func.func @_l1_partial_kernel(%arg0: i32, %arg1: i32, %arg2: i32, %arg3: memref<2xi32, #tpu.memory_space<smem>>, %arg4: memref<1x1x8x128xf32, #tpu.memory_space<vmem>>, %arg5: memref<1x1x8x128xf32, #tpu.memory_space<vmem>>, %arg6: memref<1x1x8x128xf32, #tpu.memory_space<vmem>>) attributes {dimension_semantics = [#tpu.dimension_semantics<parallel>, #tpu.dimension_semantics<parallel>, #tpu.dimension_semantics<arbitrary>], iteration_bounds = array<i64: 2, 1, 8>, scalar_prefetch = 1 : i64, scratch_operands = 0 : i64, tpu.core_type = #tpu.core_type<tc>, window_params = [{transform_indices = @transform_0, window_bounds = array<i64: 1, 1, 8, 128>}, {transform_indices = @transform_1, window_bounds = array<i64: 1, 1, 8, 128>}, {transform_indices = @transform_2, window_bounds = array<i64: 1, 1, 8, 128>}]} {
    %c0_i32 = arith.constant 0 : i32
    %0 = arith.cmpi eq, %arg2, %c0_i32 : i32
    %1 = arith.extui %0 : i1 to i32
    %c0_i32_0 = arith.constant 0 : i32
    %2 = arith.cmpi ne, %1, %c0_i32_0 : i32
    scf.if %2 {
      %cst = arith.constant 0.000000e+00 : f32
      %8 = vector.broadcast %cst : f32 to vector<1x1x8x128xf32>
      %c0 = arith.constant 0 : index
      %c0_2 = arith.constant 0 : index
      %c0_3 = arith.constant 0 : index
      %c0_4 = arith.constant 0 : index
      %9 = vector.load %arg6[%c0, %c0_2, %c0_3, %c0_4] : memref<1x1x8x128xf32, #tpu.memory_space<vmem>>, vector<1x1x8x128xf32>
      tpu.vector_store %arg6[%c0, %c0_2, %c0_3, %c0_4], %8 {strides = array<i32>} : memref<1x1x8x128xf32, #tpu.memory_space<vmem>>, vector<1x1x8x128xf32>,
    } else {
    }
    %3 = arith.index_cast %arg0 : i32 to index
    %4 = memref.load %arg3[%3] : memref<2xi32, #tpu.memory_space<smem>>
    %5 = arith.cmpi slt, %arg2, %4 : i32
    %6 = arith.extui %5 : i1 to i32
    %c0_i32_1 = arith.constant 0 : i32
    %7 = arith.cmpi ne, %6, %c0_i32_1 : i32
    scf.if %7 {
      %c0 = arith.constant 0 : index
      %c0_2 = arith.constant 0 : index
      %c0_3 = arith.constant 0 : index
      %c0_4 = arith.constant 0 : index
      %8 = vector.load %arg4[%c0, %c0_2, %c0_3, %c0_4] : memref<1x1x8x128xf32, #tpu.memory_space<vmem>>, vector<1x1x8x128xf32>
      %c0_5 = arith.constant 0 : index
      %c0_6 = arith.constant 0 : index
      %c0_7 = arith.constant 0 : index
      %c0_8 = arith.constant 0 : index
      %9 = vector.load %arg5[%c0_5, %c0_6, %c0_7, %c0_8] : memref<1x1x8x128xf32, #tpu.memory_space<vmem>>, vector<1x1x8x128xf32>
      %10 = arith.subf %8, %9 : vector<1x1x8x128xf32>
      %11 = math.absf %10 : vector<1x1x8x128xf32>
      %12 = vector.shape_cast %11 : vector<1x1x8x128xf32> to vector<8x128xf32>
      %c0_9 = arith.constant 0 : index
      %c0_10 = arith.constant 0 : index
      %c0_11 = arith.constant 0 : index
      %c0_12 = arith.constant 0 : index
      %13 = vector.load %arg6[%c0_9, %c0_10, %c0_11, %c0_12] : memref<1x1x8x128xf32, #tpu.memory_space<vmem>>, vector<1x1x8x128xf32>
      %14 = vector.shape_cast %12 : vector<8x128xf32> to vector<1x1x8x128xf32>
      %15 = arith.addf %13, %14 : vector<1x1x8x128xf32>
      %c0_13 = arith.constant 0 : index
      %c0_14 = arith.constant 0 : index
      %c0_15 = arith.constant 0 : index
      %c0_16 = arith.constant 0 : index
      %16 = vector.load %arg6[%c0_13, %c0_14, %c0_15, %c0_16] : memref<1x1x8x128xf32, #tpu.memory_space<vmem>>, vector<1x1x8x128xf32>
      tpu.vector_store %arg6[%c0_13, %c0_14, %c0_15, %c0_16], %15 {strides = array<i32>} : memref<1x1x8x128xf32, #tpu.memory_space<vmem>>, vector<1x1x8x128xf32>,
    } else {
    }
    return
  }
  func.func @transform_0(%arg0: i32, %arg1: i32, %arg2: i32, %arg3: memref<2xi32, #tpu.memory_space<smem>>) -> (i32, i32, i32, i32) {
    %0 = arith.index_cast %arg0 : i32 to index
    %1 = memref.load %arg3[%0] : memref<2xi32, #tpu.memory_space<smem>>
    %c1_i32 = arith.constant 1 : i32
    %2 = arith.subi %1, %c1_i32 : i32
    %c0_i32 = arith.constant 0 : i32
    %3 = arith.maxsi %2, %c0_i32 : i32
    %4 = arith.minsi %arg2, %3 : i32
    %c0_i32_0 = arith.constant 0 : i32
    %c0_i32_1 = arith.constant 0 : i32
    return %arg0, %4, %arg1, %c0_i32_0 : i32, i32, i32, i32
  }
  func.func @transform_1(%arg0: i32, %arg1: i32, %arg2: i32, %arg3: memref<2xi32, #tpu.memory_space<smem>>) -> (i32, i32, i32, i32) {
    %0 = arith.index_cast %arg0 : i32 to index
    %1 = memref.load %arg3[%0] : memref<2xi32, #tpu.memory_space<smem>>
    %c1_i32 = arith.constant 1 : i32
    %2 = arith.subi %1, %c1_i32 : i32
    %c0_i32 = arith.constant 0 : i32
    %3 = arith.maxsi %2, %c0_i32 : i32
    %4 = arith.minsi %arg2, %3 : i32
    %c0_i32_0 = arith.constant 0 : i32
    %c0_i32_1 = arith.constant 0 : i32
    return %arg0, %4, %arg1, %c0_i32_0 : i32, i32, i32, i32
  }
  func.func @transform_2(%arg0: i32, %arg1: i32, %arg2: i32, %arg3: memref<2xi32, #tpu.memory_space<smem>>) -> (i32, i32, i32, i32) {
    %c0_i32 = arith.constant 0 : i32
    %c0_i32_0 = arith.constant 0 : i32
    %c0_i32_1 = arith.constant 0 : i32
    return %arg0, %arg1, %c0_i32, %c0_i32_0 : i32, i32, i32, i32
  }
}

</mosaic_0001>

<llo_original>
// kernel: tpu_custom_call.1
$region0: #{tpu_custom_call.1}
  #allocation0 [shape = 'u32[]', space=smem, size = 0x4, offset = 0x4, fixed_abs, tag = 'smem constant byte address 0x4 - core index']
  #allocation1 [shape = 'u32[144,128]{1,0:T(1,128)}', space=vmem, size = 0x12000, scoped, tag = 'internal scratch']
  #allocation2 [shape = 's32[1]{0}', space=sflag, size = 0x4, scoped, tag = 'scoped memory for tpu_custom_call.1']
  #allocation3 [shape = 'u8[512]{0}', space=smem, size = 0x200, scoped, tag = 'prefetched SMEM operand 0']
  %s0 = inlined_call_operand.hbm [shape: s32[2], index: 0, kind: input, shape index: {}]
  %s1 = inlined_call_operand.hbm [shape: f32[2,8,8,128], index: 1, kind: input, shape index: {}]
  %s2 = inlined_call_operand.hbm [shape: f32[2,8,8,128], index: 2, kind: input, shape index: {}]
  %s3 = inlined_call_operand.hbm [shape: f32[2,1,8,128], index: 3, kind: output, shape index: {}]
  %s4 = sld [smem:[#allocation0]]
  $region57: #{tpu_custom_call.1} parent=0
    _
  %s6 = ssub.s32 1, %s4
  %s7 = scalar_select 0, %s6, %s4
  %9 = dma.hbm_to_smem %s0, 16, [#allocation3], [#allocation2]
  %10 = dma.done [#allocation2], 16
  %11 = sfence
  $region1: #{tpu_custom_call.1} parent=0
    #allocation4 [shape = 'u8[8192]{0}', space=vmem, size = 0x2000, scoped, tag = 'input window, operand 1']
    #allocation5 [shape = 's32[2]{0}', space=sflag, size = 0x8, scoped, tag = 'scoped memory for tpu_custom_call.1']
    #allocation6 [shape = 's32[2]{0}', space=sflag, size = 0x8, scoped, tag = 'scoped memory for tpu_custom_call.1']
    #allocation7 [shape = 'u8[8192]{0}', space=vmem, size = 0x2000, scoped, tag = 'input window, operand 2']
    #allocation8 [shape = 's32[2]{0}', space=sflag, size = 0x8, scoped, tag = 'scoped memory for tpu_custom_call.1']
    #allocation9 [shape = 'u8[8192]{0}', space=vmem, size = 0x2000, scoped, tag = 'output window, operand 0']
    %12 = vsyncpa [#allocation5], 0
    %s13 = scalar_lea.sflag [#allocation5], 1
    %14 = vsyncpa %s13, 0
    %15 = vsyncpa [#allocation8], 0
    %s16 = scalar_lea.sflag [#allocation8], 1
    %17 = vsyncpa %s16, 0
    %18 = vsyncpa [#allocation6], 0
    %s19 = scalar_lea.sflag [#allocation6], 1
    %20 = vsyncpa %s19, 0
    loop: start=0, step=1, limit=18
    $region2: #{tpu_custom_call.1} parent=1 // loop_pre_header
      _
    $region3: #{tpu_custom_call.1} parent=1 // loop_header
      %s22 = sphi 0, %s26
      %p23 = scmp.ge.s32.totalorder %s22, 18
      %s29 = sphi 0, %s48
      %s30 = sphi 0, %s44
      %s31 = sphi 0, %s40
      %s32 = sphi 0, %s29
      %s33 = sphi 0, %s30
      %s34 = sphi 0, %s31
      %s35 = sphi 0, %s32
      %s36 = sphi 0, %s33
      %s37 = sphi 0, %s34
      %s67 = sphi 0, %s69
      %s70 = sphi 0, %s67
      %s71 = sphi 0, %s70
      %s87 = sphi 0, %s71
      %s109 = sphi 0, %s111
      %s112 = sphi 0, %s109
      %s113 = sphi 0, %s112
      %s129 = sphi 0, %s113
      %s137 = sphi 0, %s139
      %s140 = sphi 0, %s137
      %s141 = sphi 0, %s140
      %s157 = sphi 0, %s141
    $region4: #{tpu_custom_call.1} parent=1 // loop_header_branch
      %25 = sbr.rel (%p23) target = $region8
    $region5: #{tpu_custom_call.1} parent=1 // loop_body
      %s27 = ssub.s32 %s22, 1
      %s28 = ssub.s32 %s22, 2
      %s38 = sadd.s32 1, %s31
      %p39 = scmp.ge.s32.totalorder %s38, 8
      %s40 = scalar_select %p39, 0, %s38
      %s41 = sadd.s32 1, %s30
      %s42 = scalar_select %p39, %s41, %s30
      %p43 = scmp.ge.s32.totalorder %s42, 1
      %s44 = scalar_select %p43, 0, %s42
      %s45 = sadd.s32 1, %s29
      %s46 = scalar_select %p43, %s45, %s29
      %p47 = scmp.ge.s32.totalorder %s46, 2
      %s48 = scalar_select %p47, 0, %s46
      %s49 = sld [smem:[#allocation3 + %s29]]
      %s50 = ssub.s32 %s49, 1
      %p51 = scmp.gt.s32.totalorder %s50, 0
      %s52 = scalar_select %p51, %s50, 0
      %p53 = scmp.lt.s32.totalorder %s31, %s52
      %s54 = scalar_select %p53, %s31, %s52
      %s55 = sld [smem:[#allocation3 + %s48]]
      %s56 = ssub.s32 %s55, 1
      %p57 = scmp.gt.s32.totalorder %s56, 0
      %s58 = scalar_select %p57, %s56, 0
      %p59 = scmp.lt.s32.totalorder %s40, %s58
      %s60 = scalar_select %p59, %s40, %s58
      %s61 = ssub.s32 %s29, %s48
      %s62 = ssub.s32 %s54, %s60
      %s63 = sor.u32 %s61, %s62
      %s64 = ssub.s32 %s30, %s44
      %s65 = sor.u32 %s63, %s64
      %p66 = scmp.eq.s32.totalorder %s65, 0
      %s68 = sadd.s32 %s67, 1
      %s69 = scalar_select %p66, %s67, %s68
      %p72 = pneg %p66
      %p73 = scmp.eq.s32.totalorder %s22, 15
      %p74 = por %p72, %p73
      %p75 = scmp.ne.s32.totalorder %s67, %s70
      %p76 = scmp.eq.s32.totalorder %s22, 0
      %p77 = por %p75, %p76
      %p78 = scmp.ne.s32.totalorder %s67, %s70
      %p79 = scmp.eq.s32.totalorder %s27, 15
      %p80 = por %p78, %p79
      %p81 = scmp.ne.s32.totalorder %s70, %s71
      %p82 = scmp.eq.s32.totalorder %s27, 0
      %p83 = por %p81, %p82
      %p84 = scmp.ne.s32.totalorder %s70, %s71
      %p85 = scmp.eq.s32.totalorder %s28, 15
      %p86 = por %p84, %p85
      %p88 = scmp.ne.s32.totalorder %s71, %s87
      %p89 = scmp.eq.s32.totalorder %s28, 0
      %p90 = por %p88, %p89
      %s91 = sld [smem:[#allocation3 + %s29]]
      %s92 = ssub.s32 %s91, 1
      %p93 = scmp.gt.s32.totalorder %s92, 0
      %s94 = scalar_select %p93, %s92, 0
      %p95 = scmp.lt.s32.totalorder %s31, %s94
      %s96 = scalar_select %p95, %s31, %s94
      %s97 = sld [smem:[#allocation3 + %s48]]
      %s98 = ssub.s32 %s97, 1
      %p99 = scmp.gt.s32.totalorder %s98, 0
      %s100 = scalar_select %p99, %s98, 0
      %p101 = scmp.lt.s32.totalorder %s40, %s100
      %s102 = scalar_select %p101, %s40, %s100
      %s103 = ssub.s32 %s29, %s48
      %s104 = ssub.s32 %s96, %s102
      %s105 = sor.u32 %s103, %s104
      %s106 = ssub.s32 %s30, %s44
      %s107 = sor.u32 %s105, %s106
      %p108 = scmp.eq.s32.totalorder %s107, 0
      %s110 = sadd.s32 %s109, 1
      %s111 = scalar_select %p108, %s109, %s110
      %p114 = pneg %p108
      %p115 = scmp.eq.s32.totalorder %s22, 15
      %p116 = por %p114, %p115
      %p117 = scmp.ne.s32.totalorder %s109, %s112
      %p118 = scmp.eq.s32.totalorder %s22, 0
      %p119 = por %p117, %p118
      %p120 = scmp.ne.s32.totalorder %s109, %s112
      %p121 = scmp.eq.s32.totalorder %s27, 15
      %p122 = por %p120, %p121
      %p123 = scmp.ne.s32.totalorder %s112, %s113
      %p124 = scmp.eq.s32.totalorder %s27, 0
      %p125 = por %p123, %p124
      %p126 = scmp.ne.s32.totalorder %s112, %s113
      %p127 = scmp.eq.s32.totalorder %s28, 15
      %p128 = por %p126, %p127
      %p130 = scmp.ne.s32.totalorder %s113, %s129
      %p131 = scmp.eq.s32.totalorder %s28, 0
      %p132 = por %p130, %p131
      %s133 = ssub.s32 %s29, %s48
      %s134 = ssub.s32 %s30, %s44
      %s135 = sor.u32 %s133, %s134
      %p136 = scmp.eq.s32.totalorder %s135, 0
      %s138 = sadd.s32 %s137, 1
      %s139 = scalar_select %p136, %s137, %s138
      %p142 = pneg %p136
      %p143 = scmp.eq.s32.totalorder %s22, 15
      %p144 = por %p142, %p143
      %p145 = scmp.ne.s32.totalorder %s137, %s140
      %p146 = scmp.eq.s32.totalorder %s22, 0
      %p147 = por %p145, %p146
      %p148 = scmp.ne.s32.totalorder %s137, %s140
      %p149 = scmp.eq.s32.totalorder %s27, 15
      %p150 = por %p148, %p149
      %p151 = scmp.ne.s32.totalorder %s140, %s141
      %p152 = scmp.eq.s32.totalorder %s27, 0
      %p153 = por %p151, %p152
      %p154 = scmp.ne.s32.totalorder %s140, %s141
      %p155 = scmp.eq.s32.totalorder %s28, 15
      %p156 = por %p154, %p155
      %p158 = scmp.ne.s32.totalorder %s141, %s157
      %p159 = scmp.eq.s32.totalorder %s28, 0
      %p160 = por %p158, %p159
      %p161 = scmp.le.s32.totalorder 1, %s22
      %p162 = scmp.lt.s32.totalorder %s22, 17
      %p163 = pnand %p161, %p162
      %p164 = pneg %p163
      // Predicated region
      $region9: #{tpu_custom_call.1} parent=5 // pred_check
        _
      $region10: #{tpu_custom_call.1} parent=5 // pred_check_branch
        %166 = sbr.rel (%p163) target = $region12
      $region11: #{tpu_custom_call.1} parent=5 // pred_region
        %s167 = ssub.s32 %s22, 1
      $region12: #{tpu_custom_call.1} parent=5 // pred_fallthru
        _
      %p168 = scmp.lt.s32.totalorder %s22, 16
      // Predicated region
      $region13: #{tpu_custom_call.1} parent=5 // pred_check
        %p169 = pneg %p168
      $region14: #{tpu_custom_call.1} parent=5 // pred_check_branch
        %171 = sbr.rel (%p169) target = $region16
      $region15: #{tpu_custom_call.1} parent=5 // pred_region
        // Predicated region
        $region17: #{tpu_custom_call.1} parent=15 // pred_check
          %p172 = pneg %p77
        $region18: #{tpu_custom_call.1} parent=15 // pred_check_branch
          %174 = sbr.rel (%p172) target = $region20
        $region19: #{tpu_custom_call.1} parent=15 // pred_region
          %s175 = sand.u32 %s67, 1
          %s176 = scalar_lea.sflag [#allocation5], %s175
          %s177 = sand.u32 %s67, 1
          %s178 = smul.addr %s177, 8
          %s179 = scalar_lea.vmem [#allocation4], %s178
          %s180 = sld [smem:[#allocation3 + %s29]]
          %s181 = ssub.s32 %s180, 1
          %p182 = scmp.gt.s32.totalorder %s181, 0
          %s183 = scalar_select %p182, %s181, 0
          %p184 = scmp.lt.s32.totalorder %s31, %s183
          %s185 = scalar_select %p184, %s31, %s183
          %s187 = ssub.s32 128, 128
          %188 = vsyncadd %s176, %s187
          %s189 = sadd.s32 %s30, %s185
          %s190 = smul.addr %s29, 8
          %s191 = sadd.s32 %s189, %s190
          %s192 = smul.addr %s191, 128
          %s193 = scalar_lea.hbm %s1, %s192
          %s195 = sshll.u32 %s179, 4
          %s196 = int_to_ptr.vmem [resolvable:$true] %s195
          %198 = dma.hbm_to_vmem [thread:$0]  %s193, 128, %s196, %s176
        $region20: #{tpu_custom_call.1} parent=15 // pred_fallthru
          _
        // Predicated region
        $region21: #{tpu_custom_call.1} parent=15 // pred_check
          %p199 = pneg %p119
        $region22: #{tpu_custom_call.1} parent=15 // pred_check_branch
          %201 = sbr.rel (%p199) target = $region24
        $region23: #{tpu_custom_call.1} parent=15 // pred_region
          %s202 = sand.u32 %s109, 1
          %s203 = scalar_lea.sflag [#allocation8], %s202
          %s204 = sand.u32 %s109, 1
          %s205 = smul.addr %s204, 8
          %s206 = scalar_lea.vmem [#allocation7], %s205
          %s207 = sld [smem:[#allocation3 + %s29]]
          %s208 = ssub.s32 %s207, 1
          %p209 = scmp.gt.s32.totalorder %s208, 0
          %s210 = scalar_select %p209, %s208, 0
          %p211 = scmp.lt.s32.totalorder %s31, %s210
          %s212 = scalar_select %p211, %s31, %s210
          %s214 = ssub.s32 128, 128
          %215 = vsyncadd %s203, %s214
          %s216 = sadd.s32 %s30, %s212
          %s217 = smul.addr %s29, 8
          %s218 = sadd.s32 %s216, %s217
          %s219 = smul.addr %s218, 128
          %s220 = scalar_lea.hbm %s2, %s219
          %s222 = sshll.u32 %s206, 4
          %s223 = int_to_ptr.vmem [resolvable:$true] %s222
          %225 = dma.hbm_to_vmem [thread:$0]  %s220, 128, %s223, %s203
        $region24: #{tpu_custom_call.1} parent=15 // pred_fallthru
          _
      $region16: #{tpu_custom_call.1} parent=5 // pred_fallthru
        _
      %p226 = scmp.le.s32.totalorder 1, %s22
      %p227 = scmp.lt.s32.totalorder %s22, 17
      %p228 = pnand %p226, %p227
      %p229 = pneg %p228
      // Predicated region
      $region25: #{tpu_custom_call.1} parent=5 // pred_check
        _
      $region26: #{tpu_custom_call.1} parent=5 // pred_check_branch
        %231 = sbr.rel (%p228) target = $region28
      $region27: #{tpu_custom_call.1} parent=5 // pred_region
        %s232 = ssub.s32 %s22, 1
        %s233 = sand.u32 %s70, 1
        %s234 = scalar_lea.sflag [#allocation5], %s233
        %s235 = sand.u32 %s70, 1
        %s236 = smul.addr %s235, 8
        %s237 = scalar_lea.vmem [#allocation4], %s236
        // Predicated region
        $region29: #{tpu_custom_call.1} parent=27 // pred_check
          %p238 = pneg %p83
        $region30: #{tpu_custom_call.1} parent=27 // pred_check_branch
          %240 = sbr.rel (%p238) target = $region32
        $region31: #{tpu_custom_call.1} parent=27 // pred_region
          %241 = dma.done %s234, 128
        $region32: #{tpu_custom_call.1} parent=27 // pred_fallthru
          _
        %s242 = sand.u32 %s112, 1
        %s243 = scalar_lea.sflag [#allocation8], %s242
        %s244 = sand.u32 %s112, 1
        %s245 = smul.addr %s244, 8
        %s246 = scalar_lea.vmem [#allocation7], %s245
        // Predicated region
        $region33: #{tpu_custom_call.1} parent=27 // pred_check
          %p247 = pneg %p125
        $region34: #{tpu_custom_call.1} parent=27 // pred_check_branch
          %249 = sbr.rel (%p247) target = $region36
        $region35: #{tpu_custom_call.1} parent=27 // pred_region
          %250 = dma.done %s243, 128
        $region36: #{tpu_custom_call.1} parent=27 // pred_fallthru
          _
        %s251 = sand.u32 %s70, 1
        %s252 = scalar_lea.sflag [#allocation5], %s251
        %s253 = sand.u32 %s70, 1
        %s254 = smul.addr %s253, 8
        %s255 = scalar_lea.vmem [#allocation4], %s254
        %p256 = pneg %p83
        %p257 = pneg %p80
        %s258 = sand.u32 %s112, 1
        %s259 = scalar_lea.sflag [#allocation8], %s258
        %s260 = sand.u32 %s112, 1
        %s261 = smul.addr %s260, 8
        %s262 = scalar_lea.vmem [#allocation7], %s261
        %p263 = pneg %p125
        %p264 = pneg %p122
        %p265 = pneg %p153
        %p266 = pneg %p150
        %s267 = sand.u32 %s140, 1
        %s268 = scalar_lea.sflag [#allocation6], %s267
        %s269 = sand.u32 %s140, 1
        %s270 = smul.addr %s269, 8
        %s271 = scalar_lea.vmem [#allocation9], %s270
        %s272 = sld [smem:[#allocation3 + %s32]]
        %s273 = ssub.s32 %s272, 1
        %p274 = scmp.gt.s32.totalorder %s273, 0
        %s275 = scalar_select %p274, %s273, 0
        %p276 = scmp.lt.s32.totalorder %s34, %s275
        %s277 = scalar_select %p276, %s34, %s275
        %s278 = sld [smem:[#allocation3 + %s32]]
        %s279 = ssub.s32 %s278, 1
        %p280 = scmp.gt.s32.totalorder %s279, 0
        %s281 = scalar_select %p280, %s279, 0
        %p282 = scmp.lt.s32.totalorder %s34, %s281
        %s283 = scalar_select %p282, %s34, %s281
        %p284 = scmp.eq.s32.totalorder %s34, 0
        // Predicated region
        $region37: #{tpu_custom_call.1} parent=27 // pred_check
          %p285 = pneg %p284
        $region38: #{tpu_custom_call.1} parent=27 // pred_check_branch
          %287 = sbr.rel (%p285) target = $region40
        $region39: #{tpu_custom_call.1} parent=27 // pred_region
          %288 = vst [vmem:[%s271] sm:$0xff] 0.0
        $region40: #{tpu_custom_call.1} parent=27 // pred_fallthru
          _
        %s289 = sld [smem:[#allocation3 + %s32]]
        %p290 = scmp.lt.s32.totalorder %s34, %s289
        // Predicated region
        $region41: #{tpu_custom_call.1} parent=27 // pred_check
          %p291 = pneg %p290
        $region42: #{tpu_custom_call.1} parent=27 // pred_check_branch
          %293 = sbr.rel (%p291) target = $region44
        $region43: #{tpu_custom_call.1} parent=27 // pred_region
          %v294 = vld [vmem:[%s237] sm:$0xff]
          %v295 = vld [vmem:[%s246] sm:$0xff]
          %v296 = vsub.f32 %v294, %v295
          %v297 = vand.u32 2147483647, %v296
          %v298 = vld [vmem:[%s271] sm:$0xff]
          %v299 = vadd.f32 %v298, %v297
          %300 = vst [vmem:[%s271] sm:$0xff] %v299
        $region44: #{tpu_custom_call.1} parent=27 // pred_fallthru
          _
        %s301 = sand.u32 %s140, 1
        %s302 = scalar_lea.sflag [#allocation6], %s301
        %s303 = sand.u32 %s140, 1
        %s304 = smul.addr %s303, 8
        %s305 = scalar_lea.vmem [#allocation9], %s304
        // Predicated region
        $region45: #{tpu_custom_call.1} parent=27 // pred_check
          %p306 = pneg %p150
        $region46: #{tpu_custom_call.1} parent=27 // pred_check_branch
          %308 = sbr.rel (%p306) target = $region48
        $region47: #{tpu_custom_call.1} parent=27 // pred_region
          %s310 = ssub.s32 128, 128
          %311 = vsyncadd %s302, %s310
          %s312 = sadd.s32 %s33, %s32
          %s313 = smul.addr %s312, 128
          %s314 = scalar_lea.hbm %s3, %s313
          %s316 = sshll.u32 %s305, 4
          %s317 = int_to_ptr.vmem [resolvable:$true] %s316
          %319 = dma.vmem_to_hbm [thread:$0]  %s317, 128, %s314, %s302
        $region48: #{tpu_custom_call.1} parent=27 // pred_fallthru
          _
      $region28: #{tpu_custom_call.1} parent=5 // pred_fallthru
        _
      %p320 = scmp.le.s32.totalorder 2, %s22
      // Predicated region
      $region49: #{tpu_custom_call.1} parent=5 // pred_check
        %p321 = pneg %p320
      $region50: #{tpu_custom_call.1} parent=5 // pred_check_branch
        %323 = sbr.rel (%p321) target = $region52
      $region51: #{tpu_custom_call.1} parent=5 // pred_region
        %s324 = ssub.s32 %s22, 2
        // Predicated region
        $region53: #{tpu_custom_call.1} parent=51 // pred_check
          %p325 = pneg %p156
        $region54: #{tpu_custom_call.1} parent=51 // pred_check_branch
          %327 = sbr.rel (%p325) target = $region56
        $region55: #{tpu_custom_call.1} parent=51 // pred_region
          %s328 = sand.u32 %s141, 1
          %s329 = scalar_lea.sflag [#allocation6], %s328
          %s330 = sand.u32 %s141, 1
          %s331 = smul.addr %s330, 8
          %s332 = scalar_lea.vmem [#allocation9], %s331
          %333 = dma.done %s329, 128
        $region56: #{tpu_custom_call.1} parent=51 // pred_fallthru
          _
      $region52: #{tpu_custom_call.1} parent=5 // pred_fallthru
        _
    $region6: #{tpu_custom_call.1} parent=1 // loop_footer
      %s26 = sadd.s32 1, %s22
    $region7: #{tpu_custom_call.1} parent=1 // loop_footer_branch
      %21 = sbr.rel target = $region3
    $region8: #{tpu_custom_call.1} parent=1 // loop_exit
      _
    %334 = vsyncpa [#allocation5], 1
    %s335 = scalar_lea.sflag [#allocation5], 1
    %336 = vsyncpa %s335, 1
    %337 = vsyncpa [#allocation8], 1
    %s338 = scalar_lea.sflag [#allocation8], 1
    %339 = vsyncpa %s338, 1
    %340 = vsyncpa [#allocation6], 1
    %s341 = scalar_lea.sflag [#allocation6], 1
    %342 = vsyncpa %s341, 1

</llo_original>
